<compile_context>
chip_gen: v6e
topology: v6e:2x2x1
jax: 0.10.0
libtpu: 0.0.40
codegen_flags: <defaults>
</compile_context>

<pallas_src>
import jax
import jax.numpy as jnp
import numpy as np
from jax import lax
from jax.experimental import pallas as pl
from jax.experimental.pallas import tpu as pltpu

INPUT_MEAN = jnp.array([0.2788, 0.2657, 0.2629], dtype=jnp.float32)
INPUT_STD = jnp.array([0.2064, 0.1944, 0.2252], dtype=jnp.float32)

N_WAYPOINTS = 3
C_IN = 3                      # input channels (RGB)
C_MID = 3                     # Conv2d(3, 3, 3)
C_OUT = 2 * N_WAYPOINTS       # Conv2d(3, 6, 3)
K = 3                         # kernel size, padding = 1, stride = 1
PATCH = 5                     # 5x5 input patch -> 3x3 conv1 window -> center conv2 output

N_PATCH = C_IN * PATCH * PATCH   # 75 flattened patch elements
N_H1 = C_MID * K * K             # 27 conv1 center-window outputs

# padded GEMM dims (sublane-friendly)
KP = 80    # 75 patch elems + 1 ones/bias row + 4 zero pad   (contraction of GEMM 1)
M1 = 32    # 27 h1 rows     + 1 ones row      + 4 zero pad   (rows of GEMM 1 / contraction of GEMM 2)
M2 = 8     # 6 outputs                        + 2 zero pad   (rows of GEMM 2)


def cnn_planner_kernel(w1_ref, w2_ref, x_ref, out_ref):
    """h1 = relu(W1 @ x); out = relu(W2 @ h1) -- two tiny MXU matmuls.

    w1_ref: (32, 80)  im2col'd conv1 weights, normalization + bias folded in
    w2_ref: (8, 32)   im2col'd conv2 weights, bias folded in (via ones row)
    x_ref:  (80, TB)  flattened 5x5x3 center patch + ones row, batch on lanes
    out_ref:(8, TB)   rows 0..5 = conv2 center-pixel channels
    """
    h1 = jnp.maximum(
        jnp.dot(w1_ref[...], x_ref[...],
                preferred_element_type=jnp.float32,
                precision=lax.Precision.HIGHEST),
        0.0)
    out_ref[...] = jnp.maximum(
        jnp.dot(w2_ref[...], h1,
                preferred_element_type=jnp.float32,
                precision=lax.Precision.HIGHEST),
        0.0)


def _build_gemm_weights(params):
    """Fold normalization into conv1 and im2col both convs into dense GEMM weights."""
    mean = params["mean"].astype(jnp.float32)
    std = params["std"].astype(jnp.float32)
    w1 = params["w1"].astype(jnp.float32)     # (3, 3, 3, 3) OIHW
    b1 = params["b1"].astype(jnp.float32)     # (3,)
    w2 = params["w2"].astype(jnp.float32)     # (6, 3, 3, 3) OIHW
    b2 = params["b2"].astype(jnp.float32)     # (6,)

    inv_std = 1.0 / std
    # (x - mean) / std folded into conv1 (exact: center RF touches no zero padding for H, W >= 5)
    w1n = w1 * inv_std[None, :, None, None]
    b1_eff = b1 - jnp.einsum("oihw,i->o", w1, mean * inv_std)

    # Static scatter pattern (built with numpy; one gather + one scatter at trace time):
    #   h1 row   r = co*9 + rh*3 + rw              (rh, rw = position in the 3x3 center window)
    #   patch col p = ci*25 + (rh+kh)*5 + (rw+kw)  (flattened 5x5x3 patch index)
    rows, cols, src = [], [], []
    for co in range(C_MID):
        for rh in range(K):
            for rw in range(K):
                r = (co * K + rh) * K + rw
                for ci in range(C_IN):
                    for kh in range(K):
                        for kw in range(K):
                            rows.append(r)
                            cols.append(ci * PATCH * PATCH + (rh + kh) * PATCH + (rw + kw))
                            src.append(((co * C_IN + ci) * K + kh) * K + kw)
    rows = np.asarray(rows, np.int32)
    cols = np.asarray(cols, np.int32)
    src = np.asarray(src, np.int32)

    W1 = jnp.zeros((M1, KP), jnp.float32)
    W1 = W1.at[rows, cols].set(w1n.reshape(-1)[src])
    W1 = W1.at[np.arange(N_H1), N_PATCH].set(b1_eff[np.arange(N_H1) // (K * K)])  # bias via ones row
    W1 = W1.at[N_H1, N_PATCH].set(1.0)   # propagate the ones row: h1[27] == relu(1) == 1

    W2 = jnp.zeros((M2, M1), jnp.float32)
    W2 = W2.at[:C_OUT, :N_H1].set(w2.reshape(C_OUT, N_H1))
    W2 = W2.at[:C_OUT, N_H1].set(b2)     # conv2 bias via the propagated ones row
    return W1, W2


def cnn_planner_forward(image, params):
    """image: (B, 3, H, W) float32 in [0, 1] -> waypoints (B, n_waypoints, 2)."""
    B, C, H, W = image.shape
    assert C == C_IN
    if H < PATCH or W < PATCH:
        # TODO(synk): tiny-image fallback (the 5x5 center patch would touch the zero-padded border).
        raise ValueError("center-crop fast path requires H >= 5 and W >= 5")

    W1, W2 = _build_gemm_weights(params)

    # Flattened, lane-dense (80, B) patch slab (one fused slice/reshape/concat/transpose chain).
    h0, w0 = H // 2 - 2, W // 2 - 2
    crop = image[:, :, h0:h0 + PATCH, w0:w0 + PATCH].astype(jnp.float32).reshape(B, N_PATCH)
    ones = jnp.ones((B, 1), jnp.float32)
    zpad = jnp.zeros((B, KP - N_PATCH - 1), jnp.float32)
    x = jnp.concatenate([crop, ones, zpad], axis=1).T          # (80, B)

    # Batch tiling: lane-align to 128; one fat grid step up to 1024 lanes, then tile
    # (batch grid axis is "parallel" so v7x's two TensorCores can split the steps).
    Bp = max(128, ((B + 127) // 128) * 128)
    TB = min(Bp, 1024)
    nb = pl.cdiv(Bp, TB)
    Bp = nb * TB
    if Bp > B:
        x = jnp.pad(x, ((0, 0), (0, Bp - B)))                  # padded lanes stay all-zero

    out = pl.pallas_call(
        cnn_planner_kernel,
        out_shape=jax.ShapeDtypeStruct((M2, Bp), jnp.float32),
        grid=(nb,),
        in_specs=[
            pl.BlockSpec((M1, KP), lambda i: (0, 0)),          # W1 resident across steps
            pl.BlockSpec((M2, M1), lambda i: (0, 0)),          # W2 resident across steps
            pl.BlockSpec((KP, TB), lambda i: (0, i)),          # patch slab, batch on lanes
        ],
        out_specs=pl.BlockSpec((M2, TB), lambda i: (0, i)),
        compiler_params=pltpu.CompilerParams(dimension_semantics=("parallel",)),
    )(W1, W2, x)

    # glue: (8, Bp) -> (B, n_waypoints, 2)
    return out[:C_OUT, :B].T.reshape(B, N_WAYPOINTS, 2)


def reference_forward(image, params):
    """Plain-JAX reference (mirrors the PyTorch forward)."""
    x = (image - params["mean"][None, :, None, None]) / params["std"][None, :, None, None]
    dn = ("NCHW", "OIHW", "NCHW")
    x = jax.lax.conv_general_dilated(x, params["w1"], (1, 1), "SAME",
                                     dimension_numbers=dn,
                                     precision=jax.lax.Precision.HIGHEST)
    x = jax.nn.relu(x + params["b1"][None, :, None, None])
    x = jax.lax.conv_general_dilated(x, params["w2"], (1, 1), "SAME",
                                     dimension_numbers=dn,
                                     precision=jax.lax.Precision.HIGHEST)
    x = jax.nn.relu(x + params["b2"][None, :, None, None])
    B, _, H, W = x.shape
    return x[:, :, H // 2, W // 2].reshape(B, N_WAYPOINTS, 2)


if __name__ == "__main__":
    key = jax.random.PRNGKey(0)
    k_img, k_w1, k_b1, k_w2, k_b2 = jax.random.split(key, 5)

    B, H, W = 2, 16, 16
    image = jax.random.uniform(k_img, (B, C_IN, H, W), dtype=jnp.float32)

    # deterministic synthetic parameters (shapes from the module's __init__)
    params = {
        "mean": INPUT_MEAN,
        "std": INPUT_STD,
        "w1": 0.2 * jax.random.normal(k_w1, (C_MID, C_IN, K, K), dtype=jnp.float32),
        "b1": 0.2 * jax.random.normal(k_b1, (C_MID,), dtype=jnp.float32),
        "w2": 0.2 * jax.random.normal(k_w2, (C_OUT, C_MID, K, K), dtype=jnp.float32),
        "b2": 0.2 * jax.random.normal(k_b2, (C_OUT,), dtype=jnp.float32),
    }

    out = cnn_planner_forward(image, params)
    out = jax.block_until_ready(out)
    assert out.shape == (B, N_WAYPOINTS, 2) and out.dtype == jnp.float32

    ref = jax.block_until_ready(reference_forward(image, params))
    np.testing.assert_allclose(np.asarray(out), np.asarray(ref), rtol=1e-4, atol=1e-4)

    print("KERNEL_OK")
</pallas_src>

<mosaic_0001>
module attributes {stable_mosaic.version = 11 : i64} {
  func.func @cnn_planner_kernel(%arg0: i32, %arg1: memref<32x80xf32, #tpu.memory_space<vmem>>, %arg2: memref<8x32xf32, #tpu.memory_space<vmem>>, %arg3: memref<80x128xf32, #tpu.memory_space<vmem>>, %arg4: memref<8x128xf32, #tpu.memory_space<vmem>>) attributes {dimension_semantics = [#tpu.dimension_semantics<parallel>], iteration_bounds = array<i64: 1>, scalar_prefetch = 0 : i64, scratch_operands = 0 : i64, tpu.core_type = #tpu.core_type<tc>, window_params = [{pipeline_mode = #tpu.pipeline_mode<synchronous>, transform_indices = @transform_0, window_bounds = array<i64: 32, 80>}, {pipeline_mode = #tpu.pipeline_mode<synchronous>, transform_indices = @transform_1, window_bounds = array<i64: 8, 32>}, {transform_indices = @transform_2, window_bounds = array<i64: 80, 128>}, {transform_indices = @transform_3, window_bounds = array<i64: 8, 128>}]} {
    %c0 = arith.constant 0 : index
    %c0_0 = arith.constant 0 : index
    %0 = vector.load %arg1[%c0, %c0_0] : memref<32x80xf32, #tpu.memory_space<vmem>>, vector<32x80xf32>
    %c0_1 = arith.constant 0 : index
    %c0_2 = arith.constant 0 : index
    %1 = vector.load %arg3[%c0_1, %c0_2] : memref<80x128xf32, #tpu.memory_space<vmem>>, vector<80x128xf32>
    %cst = arith.constant dense<0.000000e+00> : vector<32x128xf32>
    %2 = tpu.matmul %0, %1, %cst {dimension_numbers = #tpu.dot_dimension_numbers<[1], [0], [0], [1], [0, 0, 1, 1], [], []>, precision = #tpu.contract_precision<fp32>} : vector<32x80xf32>, vector<80x128xf32>, vector<32x128xf32> -> vector<32x128xf32>
    %cst_3 = arith.constant 0.000000e+00 : f32
    %3 = vector.broadcast %cst_3 : f32 to vector<32x128xf32>
    %4 = arith.maximumf %2, %3 : vector<32x128xf32>
    %c0_4 = arith.constant 0 : index
    %c0_5 = arith.constant 0 : index
    %5 = vector.load %arg2[%c0_4, %c0_5] : memref<8x32xf32, #tpu.memory_space<vmem>>, vector<8x32xf32>
    %cst_6 = arith.constant dense<0.000000e+00> : vector<8x128xf32>
    %6 = tpu.matmul %5, %4, %cst_6 {dimension_numbers = #tpu.dot_dimension_numbers<[1], [0], [0], [1], [0, 0, 1, 1], [], []>, precision = #tpu.contract_precision<fp32>} : vector<8x32xf32>, vector<32x128xf32>, vector<8x128xf32> -> vector<8x128xf32>
    %cst_7 = arith.constant 0.000000e+00 : f32
    %7 = vector.broadcast %cst_7 : f32 to vector<8x128xf32>
    %8 = arith.maximumf %6, %7 : vector<8x128xf32>
    %c0_8 = arith.constant 0 : index
    %c0_9 = arith.constant 0 : index
    %9 = vector.load %arg4[%c0_8, %c0_9] : memref<8x128xf32, #tpu.memory_space<vmem>>, vector<8x128xf32>
    tpu.vector_store %arg4[%c0_8, %c0_9], %8 {strides = array<i32>} : memref<8x128xf32, #tpu.memory_space<vmem>>, vector<8x128xf32>,
    return
  }
  func.func @transform_0(%arg0: i32) -> (i32, i32) {
    %c0_i32 = arith.constant 0 : i32
    %c0_i32_0 = arith.constant 0 : i32
    %c0_i32_1 = arith.constant 0 : i32
    return %c0_i32, %c0_i32_0 : i32, i32
  }
  func.func @transform_1(%arg0: i32) -> (i32, i32) {
    %c0_i32 = arith.constant 0 : i32
    %c0_i32_0 = arith.constant 0 : i32
    %c0_i32_1 = arith.constant 0 : i32
    return %c0_i32, %c0_i32_0 : i32, i32
  }
  func.func @transform_2(%arg0: i32) -> (i32, i32) {
    %c0_i32 = arith.constant 0 : i32
    %c0_i32_0 = arith.constant 0 : i32
    return %c0_i32, %arg0 : i32, i32
  }
  func.func @transform_3(%arg0: i32) -> (i32, i32) {
    %c0_i32 = arith.constant 0 : i32
    %c0_i32_0 = arith.constant 0 : i32
    return %c0_i32, %arg0 : i32, i32
  }
}

</mosaic_0001>

<llo_original>
// kernel: tpu_custom_call.1
$region0: #{tpu_custom_call.1}
  #allocation0 [shape = 'u32[]', space=smem, size = 0x4, offset = 0x4, fixed_abs, tag = 'smem constant byte address 0x4 - core index']
  #allocation1 [shape = 'u32[144,128]{1,0:T(1,128)}', space=vmem, size = 0x12000, scoped, tag = 'internal scratch']
  %s0 = inlined_call_operand.hbm [shape: f32[32,80], index: 0, kind: input, shape index: {}]
  %s1 = inlined_call_operand.hbm [shape: f32[8,32], index: 1, kind: input, shape index: {}]
  %s2 = inlined_call_operand.hbm [shape: f32[80,128], index: 2, kind: input, shape index: {}]
  %s3 = inlined_call_operand.hbm [shape: f32[8,128], index: 3, kind: output, shape index: {}]
  %s4 = sld [smem:[#allocation0]]
  $region34: #{tpu_custom_call.1} parent=0
    _
  %s6 = ssub.s32 1, %s4
  %s7 = scalar_select 0, %s6, %s4
  $region1: #{tpu_custom_call.1} parent=0
    #allocation2 [shape = 'u8[16384]{0}', space=vmem, size = 0x4000, scoped, tag = 'input window, operand 0, single buffered']
    #allocation3 [shape = 's32[1]{0}', space=sflag, size = 0x4, scoped, tag = 'scoped memory for tpu_custom_call.1']
    #allocation4 [shape = 's32[1]{0}', space=sflag, size = 0x4, scoped, tag = 'scoped memory for tpu_custom_call.1']
    #allocation5 [shape = 'u8[4096]{0}', space=vmem, size = 0x1000, scoped, tag = 'input window, operand 1, single buffered']
    #allocation6 [shape = 's32[1]{0}', space=sflag, size = 0x4, scoped, tag = 'scoped memory for tpu_custom_call.1']
    #allocation7 [shape = 'u8[40960]{0}', space=vmem, size = 0xa000, scoped, tag = 'input window, operand 2, single buffered']
    #allocation8 [shape = 'u8[4096]{0}', space=vmem, size = 0x1000, scoped, tag = 'output window, operand 0, single buffered']
    %8 = vsyncpa [#allocation3], 0
    %9 = vsyncpa [#allocation6], 0
    %10 = vsyncpa [#allocation4], 0
    // Predicated region
    $region2: #{tpu_custom_call.1} parent=1 // pred_check
      _
    $region3: #{tpu_custom_call.1} parent=1 // pred_check_branch
      %12 = sbr.rel (0) target = $region5
    $region4: #{tpu_custom_call.1} parent=1 // pred_region
      %s14 = ssub.s32 512, 512
      %15 = vsyncadd [#allocation3], %s14
      %s16 = sshll.u32 [#allocation2], 4
      %s17 = int_to_ptr.vmem [resolvable:$true] %s16
      %22 = dma.hbm_to_vmem [thread:$0]  %s0, 512, %s17, [#allocation3], 128, 128, 8
    $region5: #{tpu_custom_call.1} parent=1 // pred_fallthru
      _
    // Predicated region
    $region6: #{tpu_custom_call.1} parent=1 // pred_check
      _
    $region7: #{tpu_custom_call.1} parent=1 // pred_check_branch
      %24 = sbr.rel (0) target = $region9
    $region8: #{tpu_custom_call.1} parent=1 // pred_region
      %s26 = ssub.s32 128, 128
      %27 = vsyncadd [#allocation6], %s26
      %s29 = sshll.u32 [#allocation5], 4
      %s30 = int_to_ptr.vmem [resolvable:$true] %s29
      %32 = dma.hbm_to_vmem [thread:$0]  %s1, 128, %s30, [#allocation6]
    $region9: #{tpu_custom_call.1} parent=1 // pred_fallthru
      _
    // Predicated region
    $region10: #{tpu_custom_call.1} parent=1 // pred_check
      _
    $region11: #{tpu_custom_call.1} parent=1 // pred_check_branch
      %34 = sbr.rel (0) target = $region13
    $region12: #{tpu_custom_call.1} parent=1 // pred_region
      %s36 = ssub.s32 1280, 1280
      %37 = vsyncadd [#allocation6], %s36
      %s38 = sshll.u32 [#allocation7], 4
      %s39 = int_to_ptr.vmem [resolvable:$true] %s38
      %44 = dma.hbm_to_vmem [thread:$0]  %s2, 1280, %s39, [#allocation6], 128, 128, 8
    $region13: #{tpu_custom_call.1} parent=1 // pred_fallthru
      _
    // Predicated region
    $region14: #{tpu_custom_call.1} parent=1 // pred_check
      _
    $region15: #{tpu_custom_call.1} parent=1 // pred_check_branch
      %46 = sbr.rel (0) target = $region17
    $region16: #{tpu_custom_call.1} parent=1 // pred_region
      %47 = dma.done [#allocation3], 512
    $region17: #{tpu_custom_call.1} parent=1 // pred_fallthru
      _
    // Predicated region
    $region18: #{tpu_custom_call.1} parent=1 // pred_check
      _
    $region19: #{tpu_custom_call.1} parent=1 // pred_check_branch
      %49 = sbr.rel (0) target = $region21
    $region20: #{tpu_custom_call.1} parent=1 // pred_region
      %50 = dma.done [#allocation6], 128
    $region21: #{tpu_custom_call.1} parent=1 // pred_fallthru
      _
    // Predicated region
    $region22: #{tpu_custom_call.1} parent=1 // pred_check
      _
    $region23: #{tpu_custom_call.1} parent=1 // pred_check_branch
      %52 = sbr.rel (0) target = $region25
    $region24: #{tpu_custom_call.1} parent=1 // pred_region
      %53 = dma.done [#allocation6], 1280
    $region25: #{tpu_custom_call.1} parent=1 // pred_fallthru
      _
    %v54 = vld [vmem:[#allocation2] sm:$0xff]
    %v55 = vld [vmem:[#allocation2 + $0x8] sm:$0xff]
    %v56 = vld [vmem:[#allocation2 + $0x10] sm:$0xff]
    %v57 = vld [vmem:[#allocation2 + $0x18] sm:$0xff]
    %v58 = vld [vmem:[#allocation7] sm:$0xff]
    %v59 = vld [vmem:[#allocation7 + $0x8] sm:$0xff]
    %v60 = vld [vmem:[#allocation7 + $0x10] sm:$0xff]
    %v61 = vld [vmem:[#allocation7 + $0x18] sm:$0xff]
    %v62 = vld [vmem:[#allocation7 + $0x20] sm:$0xff]
    %v63 = vld [vmem:[#allocation7 + $0x28] sm:$0xff]
    %v64 = vld [vmem:[#allocation7 + $0x30] sm:$0xff]
    %v65 = vld [vmem:[#allocation7 + $0x38] sm:$0xff]
    %v66 = vld [vmem:[#allocation7 + $0x40] sm:$0xff]
    %v67 = vld [vmem:[#allocation7 + $0x48] sm:$0xff]
    %vm68 = vcmask 654336
    %v70 = vsel %vm68, %v54, 0
    %v73 = vsel %vm68, %v55, 0
    %v76 = vsel %vm68, %v56, 0
    %v79 = vsel %vm68, %v57, 0
    %81 = vmatprep.subr.mxu0 0.0
    %82 = vmatpush1.msra.mxu0 0.0
    %83 = vmatprep.subr.mxu0 0.0
    %84 = vmatpush1.msra.mxu0 0.0
    %85 = vmatprep.subr.mxu0 0.0
    %86 = vmatpush1.msra.mxu0 0.0
    %87 = vmatprep.subr.mxu0 0.0
    %88 = vmatpush1.msra.mxu0 0.0
    %89 = vmatprep.subr.mxu0 0.0
    %90 = vmatpush1.msra.mxu0 0.0
    %91 = vmatprep.subr.mxu0 0.0
    %92 = vmatpush1.msra.mxu0 0.0
    %93 = vmatprep.subr.mxu0 0.0
    %v94 = vand.u32 %v67, 4294901760
    %95 = vmatpush1.msra.mxu0 %v94
    %96 = vmatprep.subr.mxu0 0.0
    %v97 = vand.u32 %v66, 4294901760
    %98 = vmatpush1.msra.mxu0 %v97
    %99 = vmatprep.subr.mxu0 0.0
    %v100 = vand.u32 %v65, 4294901760
    %101 = vmatpush1.msra.mxu0 %v100
    %102 = vmatprep.subr.mxu0 0.0
    %v103 = vand.u32 %v64, 4294901760
    %104 = vmatpush1.msra.mxu0 %v103
    %105 = vmatprep.subr.mxu0 0.0
    %v106 = vand.u32 %v63, 4294901760
    %107 = vmatpush1.msra.mxu0 %v106
    %108 = vmatprep.subr.mxu0 0.0
    %v109 = vand.u32 %v62, 4294901760
    %110 = vmatpush1.msra.mxu0 %v109
    %111 = vmatprep.subr.mxu0 0.0
    %v112 = vand.u32 %v61, 4294901760
    %113 = vmatpush1.msra.mxu0 %v112
    %114 = vmatprep.subr.mxu0 0.0
    %v115 = vand.u32 %v60, 4294901760
    %116 = vmatpush1.msra.mxu0 %v115
    %117 = vmatprep.subr.mxu0 0.0
    %v118 = vand.u32 %v59, 4294901760
    %119 = vmatpush1.msra.mxu0 %v118
    %120 = vmatprep.subr.mxu0 0.0
    %v121 = vand.u32 %v58, 4294901760
    %122 = vmatpush1.msra.mxu0 %v121
    %123 = vmatprep.subr.mxu0 0.0
    %124 = vmatpush2.msra.mxu0 0.0
    %125 = vmatprep.subr.mxu0 0.0
    %126 = vmatpush2.msra.mxu0 0.0
    %127 = vmatprep.subr.mxu0 0.0
    %128 = vmatpush2.msra.mxu0 0.0
    %129 = vmatprep.subr.mxu0 0.0
    %130 = vmatpush2.msra.mxu0 0.0
    %131 = vmatprep.subr.mxu0 0.0
    %132 = vmatpush2.msra.mxu0 0.0
    %133 = vmatprep.subr.mxu0 0.0
    %134 = vmatpush2.msra.mxu0 0.0
    %135 = vmatprep.subr.mxu0 0.0
    %136 = vmatpush2.msra.mxu0 0.0
    %137 = vmatprep.subr.mxu0 0.0
    %138 = vmatpush2.msra.mxu0 0.0
    %139 = vmatprep.subr.mxu0 0.0
    %140 = vmatpush2.msra.mxu0 0.0
    %141 = vmatprep.subr.mxu0 0.0
    %142 = vmatpush2.msra.mxu0 0.0
    %143 = vmatprep.subr.mxu0 0.0
    %144 = vmatpush2.msra.mxu0 0.0
    %145 = vmatprep.subr.mxu0 0.0
    %146 = vmatpush2.msra.mxu0 0.0
    %147 = vmatprep.subr.mxu0 0.0
    %148 = vmatpush2.msra.mxu0 0.0
    %149 = vmatprep.subr.mxu0 0.0
    %150 = vmatpush2.msra.mxu0 0.0
    %151 = vmatprep.subr.mxu0 0.0
    %152 = vmatpush2.msra.mxu0 0.0
    %153 = vmatprep.subr.mxu0 0.0
    %154 = vmatpush2.msra.mxu0 0.0
    %155 = vmatprep.mubr.f32.mxu0 0.0
    %v156 = vand.u32 %v70, 4294901760
    %v157 = vsub.f32 %v70, %v156
    %v158 = vand.u32 %v157, 4294901760
    %v159 = vsub.f32 %v157, %v158
    %v160 = vand.u32 %v159, 4294901760
    %161 = vmatmul.mubr.f32.gmra.mxu0 %v160
    %v162 = vpop.f32.mrf.mxu0
    %v163 = vadd.f32 0.0, %v162
    %v164 = vpop.f32.mrf.mxu0
    %165 = vmatprep.mubr.f32.mxu0 0.0
    %v166 = vand.u32 %v73, 4294901760
    %v167 = vsub.f32 %v73, %v166
    %v168 = vand.u32 %v167, 4294901760
    %v169 = vsub.f32 %v167, %v168
    %v170 = vand.u32 %v169, 4294901760
    %171 = vmatmul.mubr.f32.gmra.mxu0 %v170
    %v172 = vpop.f32.mrf.mxu0
    %v173 = vadd.f32 0.0, %v172
    %v174 = vpop.f32.mrf.mxu0
    %175 = vmatprep.mubr.f32.mxu0 0.0
    %v176 = vand.u32 %v76, 4294901760
    %v177 = vsub.f32 %v76, %v176
    %v178 = vand.u32 %v177, 4294901760
    %v179 = vsub.f32 %v177, %v178
    %v180 = vand.u32 %v179, 4294901760
    %181 = vmatmul.mubr.f32.gmra.mxu0 %v180
    %v182 = vpop.f32.mrf.mxu0
    %v183 = vadd.f32 0.0, %v182
    %v184 = vpop.f32.mrf.mxu0
    %185 = vmatprep.mubr.f32.mxu0 0.0
    %v186 = vand.u32 %v79, 4294901760
    %v187 = vsub.f32 %v79, %v186
    %v188 = vand.u32 %v187, 4294901760
    %v189 = vsub.f32 %v187, %v188
    %v190 = vand.u32 %v189, 4294901760
    %191 = vmatmul.mubr.f32.gmra.mxu0 %v190
    %v192 = vpop.f32.mrf.mxu0
    %v193 = vadd.f32 0.0, %v192
    %v194 = vpop.f32.mrf.mxu0
    %195 = vdwg.mxu0
    %196 = vmatprep.subr.mxu0 0.0
    %197 = vmatpush1.msra.mxu0 0.0
    %198 = vmatprep.subr.mxu0 0.0
    %199 = vmatpush1.msra.mxu0 0.0
    %200 = vmatprep.subr.mxu0 0.0
    %201 = vmatpush1.msra.mxu0 0.0
    %202 = vmatprep.subr.mxu0 0.0
    %203 = vmatpush1.msra.mxu0 0.0
    %204 = vmatprep.subr.mxu0 0.0
    %205 = vmatpush1.msra.mxu0 0.0
    %206 = vmatprep.subr.mxu0 0.0
    %207 = vmatpush1.msra.mxu0 0.0
    %208 = vmatprep.subr.mxu0 0.0
    %v209 = vand.u32 %v67, 4294901760
    %v210 = vsub.f32 %v67, %v209
    %v211 = vand.u32 %v210, 4294901760
    %v212 = vsub.f32 %v210, %v211
    %v213 = vand.u32 %v212, 4294901760
    %214 = vmatpush1.msra.mxu0 %v213
    %215 = vmatprep.subr.mxu0 0.0
    %v216 = vand.u32 %v66, 4294901760
    %v217 = vsub.f32 %v66, %v216
    %v218 = vand.u32 %v217, 4294901760
    %v219 = vsub.f32 %v217, %v218
    %v220 = vand.u32 %v219, 4294901760
    %221 = vmatpush1.msra.mxu0 %v220
    %222 = vmatprep.subr.mxu0 0.0
    %v223 = vand.u32 %v65, 4294901760
    %v224 = vsub.f32 %v65, %v223
    %v225 = vand.u32 %v224, 4294901760
    %v226 = vsub.f32 %v224, %v225
    %v227 = vand.u32 %v226, 4294901760
    %228 = vmatpush1.msra.mxu0 %v227
    %229 = vmatprep.subr.mxu0 0.0
    %v230 = vand.u32 %v64, 4294901760
    %v231 = vsub.f32 %v64, %v230
    %v232 = vand.u32 %v231, 4294901760
    %v233 = vsub.f32 %v231, %v232
    %v234 = vand.u32 %v233, 4294901760
    %235 = vmatpush1.msra.mxu0 %v234
    %236 = vmatprep.subr.mxu0 0.0
    %v237 = vand.u32 %v63, 4294901760
    %v238 = vsub.f32 %v63, %v237
    %v239 = vand.u32 %v238, 4294901760
    %v240 = vsub.f32 %v238, %v239
    %v241 = vand.u32 %v240, 4294901760
    %242 = vmatpush1.msra.mxu0 %v241
    %243 = vmatprep.subr.mxu0 0.0
    %v244 = vand.u32 %v62, 4294901760
    %v245 = vsub.f32 %v62, %v244
    %v246 = vand.u32 %v245, 4294901760
    %v247 = vsub.f32 %v245, %v246
    %v248 = vand.u32 %v247, 4294901760
    %249 = vmatpush1.msra.mxu0 %v248
    %250 = vmatprep.subr.mxu0 0.0
    %v251 = vand.u32 %v61, 4294901760
    %v252 = vsub.f32 %v61, %v251
    %v253 = vand.u32 %v252, 4294901760
    %v254 = vsub.f32 %v252, %v253
    %v255 = vand.u32 %v254, 4294901760
    %256 = vmatpush1.msra.mxu0 %v255
    %257 = vmatprep.subr.mxu0 0.0
    %v258 = vand.u32 %v60, 4294901760
    %v259 = vsub.f32 %v60, %v258
    %v260 = vand.u32 %v259, 4294901760
    %v261 = vsub.f32 %v259, %v260
    %v262 = vand.u32 %v261, 4294901760
    %263 = vmatpush1.msra.mxu0 %v262
    %264 = vmatprep.subr.mxu0 0.0
    %v265 = vand.u32 %v59, 4294901760
    %v266 = vsub.f32 %v59, %v265
    %v267 = vand.u32 %v266, 4294901760
    %v268 = vsub.f32 %v266, %v267
    %v269 = vand.u32 %v268, 4294901760
    %270 = vmatpush1.msra.mxu0 %v269
    %271 = vmatprep.subr.mxu0 0.0
    %v272 = vand.u32 %v58, 4294901760
    %v273 = vsub.f32 %v58, %v272
    %v274 = vand.u32 %v273, 4294901760
    %v275 = vsub.f32 %v273, %v274
    %v276 = vand.u32 %v275, 4294901760
    %277 = vmatpush1.msra.mxu0 %v276
    %278 = vmatprep.subr.mxu0 0.0
    %279 = vmatpush2.msra.mxu0 0.0
    %280 = vmatprep.subr.mxu0 0.0
    %281 = vmatpush2.msra.mxu0 0.0
    %282 = vmatprep.subr.mxu0 0.0
    %283 = vmatpush2.msra.mxu0 0.0
    %284 = vmatprep.subr.mxu0 0.0
    %285 = vmatpush2.msra.mxu0 0.0
    %286 = vmatprep.subr.mxu0 0.0
    %287 = vmatpush2.msra.mxu0 0.0
    %288 = vmatprep.subr.mxu0 0.0
    %289 = vmatpush2.msra.mxu0 0.0
    %290 = vmatprep.subr.mxu0 0.0
    %291 = vmatpush2.msra.mxu0 0.0
    %292 = vmatprep.subr.mxu0 0.0
    %293 = vmatpush2.msra.mxu0 0.0
    %294 = vmatprep.subr.mxu0 0.0
    %295 = vmatpush2.msra.mxu0 0.0
    %296 = vmatprep.subr.mxu0 0.0
    %297 = vmatpush2.msra.mxu0 0.0
    %298 = vmatprep.subr.mxu0 0.0
    %299 = vmatpush2.msra.mxu0 0.0
    %300 = vmatprep.subr.mxu0 0.0
    %301 = vmatpush2.msra.mxu0 0.0
    %302 = vmatprep.subr.mxu0 0.0
    %303 = vmatpush2.msra.mxu0 0.0
    %304 = vmatprep.subr.mxu0 0.0
    %305 = vmatpush2.msra.mxu0 0.0
    %306 = vmatprep.subr.mxu0 0.0
    %307 = vmatpush2.msra.mxu0 0.0
    %308 = vmatprep.subr.mxu0 0.0
    %309 = vmatpush2.msra.mxu0 0.0
    %310 = vmatprep.mubr.f32.mxu0 0.0
    %v311 = vand.u32 %v70, 4294901760
    %312 = vmatmul.mubr.f32.gmra.mxu0 %v311
    %v313 = vpop.f32.mrf.mxu0
    %v314 = vadd.f32 %v163, %v313
    %v315 = vpop.f32.mrf.mxu0
    %316 = vmatprep.mubr.f32.mxu0 0.0
    %v317 = vand.u32 %v73, 4294901760
    %318 = vmatmul.mubr.f32.gmra.mxu0 %v317
    %v319 = vpop.f32.mrf.mxu0
    %v320 = vadd.f32 %v173, %v319
    %v321 = vpop.f32.mrf.mxu0
    %322 = vmatprep.mubr.f32.mxu0 0.0
    %v323 = vand.u32 %v76, 4294901760
    %324 = vmatmul.mubr.f32.gmra.mxu0 %v323
    %v325 = vpop.f32.mrf.mxu0
    %v326 = vadd.f32 %v183, %v325
    %v327 = vpop.f32.mrf.mxu0
    %328 = vmatprep.mubr.f32.mxu0 0.0
    %v329 = vand.u32 %v79, 4294901760
    %330 = vmatmul.mubr.f32.gmra.mxu0 %v329
    %v331 = vpop.f32.mrf.mxu0
    %v332 = vadd.f32 %v193, %v331
    %v333 = vpop.f32.mrf.mxu0
    %334 = vdwg.mxu0
    %335 = vmatprep.subr.mxu0 0.0
    %336 = vmatpush1.msra.mxu0 0.0
    %337 = vmatprep.subr.mxu0 0.0
    %338 = vmatpush1.msra.mxu0 0.0
    %339 = vmatprep.subr.mxu0 0.0
    %340 = vmatpush1.msra.mxu0 0.0
    %341 = vmatprep.subr.mxu0 0.0
    %342 = vmatpush1.msra.mxu0 0.0
    %343 = vmatprep.subr.mxu0 0.0
    %344 = vmatpush1.msra.mxu0 0.0
    %345 = vmatprep.subr.mxu0 0.0
    %346 = vmatpush1.msra.mxu0 0.0
    %347 = vmatprep.subr.mxu0 0.0
    %v348 = vand.u32 %v67, 4294901760
    %v349 = vsub.f32 %v67, %v348
    %350 = vmatpush1.msra.mxu0 %v349
    %351 = vmatprep.subr.mxu0 0.0
    %v352 = vand.u32 %v66, 4294901760
    %v353 = vsub.f32 %v66, %v352
    %354 = vmatpush1.msra.mxu0 %v353
    %355 = vmatprep.subr.mxu0 0.0
    %v356 = vand.u32 %v65, 4294901760
    %v357 = vsub.f32 %v65, %v356
    %358 = vmatpush1.msra.mxu0 %v357
    %359 = vmatprep.subr.mxu0 0.0
    %v360 = vand.u32 %v64, 4294901760
    %v361 = vsub.f32 %v64, %v360
    %362 = vmatpush1.msra.mxu0 %v361
    %363 = vmatprep.subr.mxu0 0.0
    %v364 = vand.u32 %v63, 4294901760
    %v365 = vsub.f32 %v63, %v364
    %366 = vmatpush1.msra.mxu0 %v365
    %367 = vmatprep.subr.mxu0 0.0
    %v368 = vand.u32 %v62, 4294901760
    %v369 = vsub.f32 %v62, %v368
    %370 = vmatpush1.msra.mxu0 %v369
    %371 = vmatprep.subr.mxu0 0.0
    %v372 = vand.u32 %v61, 4294901760
    %v373 = vsub.f32 %v61, %v372
    %374 = vmatpush1.msra.mxu0 %v373
    %375 = vmatprep.subr.mxu0 0.0
    %v376 = vand.u32 %v60, 4294901760
    %v377 = vsub.f32 %v60, %v376
    %378 = vmatpush1.msra.mxu0 %v377
    %379 = vmatprep.subr.mxu0 0.0
    %v380 = vand.u32 %v59, 4294901760
    %v381 = vsub.f32 %v59, %v380
    %382 = vmatpush1.msra.mxu0 %v381
    %383 = vmatprep.subr.mxu0 0.0
    %v384 = vand.u32 %v58, 4294901760
    %v385 = vsub.f32 %v58, %v384
    %386 = vmatpush1.msra.mxu0 %v385
    %387 = vmatprep.subr.mxu0 0.0
    %388 = vmatpush2.msra.mxu0 0.0
    %389 = vmatprep.subr.mxu0 0.0
    %390 = vmatpush2.msra.mxu0 0.0
    %391 = vmatprep.subr.mxu0 0.0
    %392 = vmatpush2.msra.mxu0 0.0
    %393 = vmatprep.subr.mxu0 0.0
    %394 = vmatpush2.msra.mxu0 0.0
    %395 = vmatprep.subr.mxu0 0.0
    %396 = vmatpush2.msra.mxu0 0.0
    %397 = vmatprep.subr.mxu0 0.0
    %398 = vmatpush2.msra.mxu0 0.0
    %399 = vmatprep.subr.mxu0 0.0
    %400 = vmatpush2.msra.mxu0 0.0
    %401 = vmatprep.subr.mxu0 0.0
    %402 = vmatpush2.msra.mxu0 0.0
    %403 = vmatprep.subr.mxu0 0.0
    %404 = vmatpush2.msra.mxu0 0.0
    %405 = vmatprep.subr.mxu0 0.0
    %406 = vmatpush2.msra.mxu0 0.0
    %407 = vmatprep.subr.mxu0 0.0
    %408 = vmatpush2.msra.mxu0 0.0
    %409 = vmatprep.subr.mxu0 0.0
    %410 = vmatpush2.msra.mxu0 0.0
    %411 = vmatprep.subr.mxu0 0.0
    %412 = vmatpush2.msra.mxu0 0.0
    %413 = vmatprep.subr.mxu0 0.0
    %414 = vmatpush2.msra.mxu0 0.0
    %415 = vmatprep.subr.mxu0 0.0
    %416 = vmatpush2.msra.mxu0 0.0
    %417 = vmatprep.subr.mxu0 0.0
    %418 = vmatpush2.msra.mxu0 0.0
    %419 = vmatprep.mubr.f32.mxu0 0.0
    %v420 = vand.u32 %v70, 4294901760
    %v421 = vsub.f32 %v70, %v420
    %422 = vmatmul.mubr.f32.gmra.mxu0 %v421
    %v423 = vpop.f32.mrf.mxu0
    %v424 = vadd.f32 %v314, %v423
    %v425 = vpop.f32.mrf.mxu0
    %426 = vmatprep.mubr.f32.mxu0 0.0
    %v427 = vand.u32 %v73, 4294901760
    %v428 = vsub.f32 %v73, %v427
    %429 = vmatmul.mubr.f32.gmra.mxu0 %v428
    %v430 = vpop.f32.mrf.mxu0
    %v431 = vadd.f32 %v320, %v430
    %v432 = vpop.f32.mrf.mxu0
    %433 = vmatprep.mubr.f32.mxu0 0.0
    %v434 = vand.u32 %v76, 4294901760
    %v435 = vsub.f32 %v76, %v434
    %436 = vmatmul.mubr.f32.gmra.mxu0 %v435
    %v437 = vpop.f32.mrf.mxu0
    %v438 = vadd.f32 %v326, %v437
    %v439 = vpop.f32.mrf.mxu0
    %440 = vmatprep.mubr.f32.mxu0 0.0
    %v441 = vand.u32 %v79, 4294901760
    %v442 = vsub.f32 %v79, %v441
    %443 = vmatmul.mubr.f32.gmra.mxu0 %v442
    %v444 = vpop.f32.mrf.mxu0
    %v445 = vadd.f32 %v332, %v444
    %v446 = vpop.f32.mrf.mxu0
    %447 = vdwg.mxu0
    %448 = vmatprep.subr.mxu0 0.0
    %449 = vmatpush1.msra.mxu0 0.0
    %450 = vmatprep.subr.mxu0 0.0
    %451 = vmatpush1.msra.mxu0 0.0
    %452 = vmatprep.subr.mxu0 0.0
    %453 = vmatpush1.msra.mxu0 0.0
    %454 = vmatprep.subr.mxu0 0.0
    %455 = vmatpush1.msra.mxu0 0.0
    %456 = vmatprep.subr.mxu0 0.0
    %457 = vmatpush1.msra.mxu0 0.0
    %458 = vmatprep.subr.mxu0 0.0
    %459 = vmatpush1.msra.mxu0 0.0
    %460 = vmatprep.subr.mxu0 0.0
    %v461 = vand.u32 %v67, 4294901760
    %462 = vmatpush1.msra.mxu0 %v461
    %463 = vmatprep.subr.mxu0 0.0
    %v464 = vand.u32 %v66, 4294901760
    %465 = vmatpush1.msra.mxu0 %v464
    %466 = vmatprep.subr.mxu0 0.0
    %v467 = vand.u32 %v65, 4294901760
    %468 = vmatpush1.msra.mxu0 %v467
    %469 = vmatprep.subr.mxu0 0.0
    %v470 = vand.u32 %v64, 4294901760
    %471 = vmatpush1.msra.mxu0 %v470
    %472 = vmatprep.subr.mxu0 0.0
    %v473 = vand.u32 %v63, 4294901760
    %474 = vmatpush1.msra.mxu0 %v473
    %475 = vmatprep.subr.mxu0 0.0
    %v476 = vand.u32 %v62, 4294901760
    %477 = vmatpush1.msra.mxu0 %v476
    %478 = vmatprep.subr.mxu0 0.0
    %v479 = vand.u32 %v61, 4294901760
    %480 = vmatpush1.msra.mxu0 %v479
    %481 = vmatprep.subr.mxu0 0.0
    %v482 = vand.u32 %v60, 4294901760
    %483 = vmatpush1.msra.mxu0 %v482
    %484 = vmatprep.subr.mxu0 0.0
    %v485 = vand.u32 %v59, 4294901760
    %486 = vmatpush1.msra.mxu0 %v485
    %487 = vmatprep.subr.mxu0 0.0
    %v488 = vand.u32 %v58, 4294901760
    %489 = vmatpush1.msra.mxu0 %v488
    %490 = vmatprep.subr.mxu0 0.0
    %491 = vmatpush2.msra.mxu0 0.0
    %492 = vmatprep.subr.mxu0 0.0
    %493 = vmatpush2.msra.mxu0 0.0
    %494 = vmatprep.subr.mxu0 0.0
    %495 = vmatpush2.msra.mxu0 0.0
    %496 = vmatprep.subr.mxu0 0.0
    %497 = vmatpush2.msra.mxu0 0.0
    %498 = vmatprep.subr.mxu0 0.0
    %499 = vmatpush2.msra.mxu0 0.0
    %500 = vmatprep.subr.mxu0 0.0
    %501 = vmatpush2.msra.mxu0 0.0
    %502 = vmatprep.subr.mxu0 0.0
    %503 = vmatpush2.msra.mxu0 0.0
    %504 = vmatprep.subr.mxu0 0.0
    %505 = vmatpush2.msra.mxu0 0.0
    %506 = vmatprep.subr.mxu0 0.0
    %507 = vmatpush2.msra.mxu0 0.0
    %508 = vmatprep.subr.mxu0 0.0
    %509 = vmatpush2.msra.mxu0 0.0
    %510 = vmatprep.subr.mxu0 0.0
    %511 = vmatpush2.msra.mxu0 0.0
    %512 = vmatprep.subr.mxu0 0.0
    %513 = vmatpush2.msra.mxu0 0.0
    %514 = vmatprep.subr.mxu0 0.0
    %515 = vmatpush2.msra.mxu0 0.0
    %516 = vmatprep.subr.mxu0 0.0
    %517 = vmatpush2.msra.mxu0 0.0
    %518 = vmatprep.subr.mxu0 0.0
    %519 = vmatpush2.msra.mxu0 0.0
    %520 = vmatprep.subr.mxu0 0.0
    %521 = vmatpush2.msra.mxu0 0.0
    %522 = vmatprep.mubr.f32.mxu0 0.0
    %v523 = vand.u32 %v70, 4294901760
    %v524 = vsub.f32 %v70, %v523
    %v525 = vand.u32 %v524, 4294901760
    %526 = vmatmul.mubr.f32.gmra.mxu0 %v525
    %v527 = vpop.f32.mrf.mxu0
    %v528 = vadd.f32 %v424, %v527
    %v529 = vpop.f32.mrf.mxu0
    %530 = vmatprep.mubr.f32.mxu0 0.0
    %v531 = vand.u32 %v73, 4294901760
    %v532 = vsub.f32 %v73, %v531
    %v533 = vand.u32 %v532, 4294901760
    %534 = vmatmul.mubr.f32.gmra.mxu0 %v533
    %v535 = vpop.f32.mrf.mxu0
    %v536 = vadd.f32 %v431, %v535
    %v537 = vpop.f32.mrf.mxu0
    %538 = vmatprep.mubr.f32.mxu0 0.0
    %v539 = vand.u32 %v76, 4294901760
    %v540 = vsub.f32 %v76, %v539
    %v541 = vand.u32 %v540, 4294901760
    %542 = vmatmul.mubr.f32.gmra.mxu0 %v541
    %v543 = vpop.f32.mrf.mxu0
    %v544 = vadd.f32 %v438, %v543
    %v545 = vpop.f32.mrf.mxu0
    %546 = vmatprep.mubr.f32.mxu0 0.0
    %v547 = vand.u32 %v79, 4294901760
    %v548 = vsub.f32 %v79, %v547
    %v549 = vand.u32 %v548, 4294901760
    %550 = vmatmul.mubr.f32.gmra.mxu0 %v549
    %v551 = vpop.f32.mrf.mxu0
    %v552 = vadd.f32 %v445, %v551
    %v553 = vpop.f32.mrf.mxu0
    %554 = vdwg.mxu0
    %555 = vmatprep.subr.mxu0 0.0
    %556 = vmatpush1.msra.mxu0 0.0
    %557 = vmatprep.subr.mxu0 0.0
    %558 = vmatpush1.msra.mxu0 0.0
    %559 = vmatprep.subr.mxu0 0.0
    %560 = vmatpush1.msra.mxu0 0.0
    %561 = vmatprep.subr.mxu0 0.0
    %562 = vmatpush1.msra.mxu0 0.0
    %563 = vmatprep.subr.mxu0 0.0
    %564 = vmatpush1.msra.mxu0 0.0
    %565 = vmatprep.subr.mxu0 0.0
    %566 = vmatpush1.msra.mxu0 0.0
    %567 = vmatprep.subr.mxu0 0.0
    %v568 = vand.u32 %v67, 4294901760
    %v569 = vsub.f32 %v67, %v568
    %v570 = vand.u32 %v569, 4294901760
    %571 = vmatpush1.msra.mxu0 %v570
    %572 = vmatprep.subr.mxu0 0.0
    %v573 = vand.u32 %v66, 4294901760
    %v574 = vsub.f32 %v66, %v573
    %v575 = vand.u32 %v574, 4294901760
    %576 = vmatpush1.msra.mxu0 %v575
    %577 = vmatprep.subr.mxu0 0.0
    %v578 = vand.u32 %v65, 4294901760
    %v579 = vsub.f32 %v65, %v578
    %v580 = vand.u32 %v579, 4294901760
    %581 = vmatpush1.msra.mxu0 %v580
    %582 = vmatprep.subr.mxu0 0.0
    %v583 = vand.u32 %v64, 4294901760
    %v584 = vsub.f32 %v64, %v583
    %v585 = vand.u32 %v584, 4294901760
    %586 = vmatpush1.msra.mxu0 %v585
    %587 = vmatprep.subr.mxu0 0.0
    %v588 = vand.u32 %v63, 4294901760
    %v589 = vsub.f32 %v63, %v588
    %v590 = vand.u32 %v589, 4294901760
    %591 = vmatpush1.msra.mxu0 %v590
    %592 = vmatprep.subr.mxu0 0.0
    %v593 = vand.u32 %v62, 4294901760
    %v594 = vsub.f32 %v62, %v593
    %v595 = vand.u32 %v594, 4294901760
    %596 = vmatpush1.msra.mxu0 %v595
    %597 = vmatprep.subr.mxu0 0.0
    %v598 = vand.u32 %v61, 4294901760
    %v599 = vsub.f32 %v61, %v598
    %v600 = vand.u32 %v599, 4294901760
    %601 = vmatpush1.msra.mxu0 %v600
    %602 = vmatprep.subr.mxu0 0.0
    %v603 = vand.u32 %v60, 4294901760
    %v604 = vsub.f32 %v60, %v603
    %v605 = vand.u32 %v604, 4294901760
    %606 = vmatpush1.msra.mxu0 %v605
    %607 = vmatprep.subr.mxu0 0.0
    %v608 = vand.u32 %v59, 4294901760
    %v609 = vsub.f32 %v59, %v608
    %v610 = vand.u32 %v609, 4294901760
    %611 = vmatpush1.msra.mxu0 %v610
    %612 = vmatprep.subr.mxu0 0.0
    %v613 = vand.u32 %v58, 4294901760
    %v614 = vsub.f32 %v58, %v613
    %v615 = vand.u32 %v614, 4294901760
    %616 = vmatpush1.msra.mxu0 %v615
    %617 = vmatprep.subr.mxu0 0.0
    %618 = vmatpush2.msra.mxu0 0.0
    %619 = vmatprep.subr.mxu0 0.0
    %620 = vmatpush2.msra.mxu0 0.0
    %621 = vmatprep.subr.mxu0 0.0
    %622 = vmatpush2.msra.mxu0 0.0
    %623 = vmatprep.subr.mxu0 0.0
    %624 = vmatpush2.msra.mxu0 0.0
    %625 = vmatprep.subr.mxu0 0.0
    %626 = vmatpush2.msra.mxu0 0.0
    %627 = vmatprep.subr.mxu0 0.0
    %628 = vmatpush2.msra.mxu0 0.0
    %629 = vmatprep.subr.mxu0 0.0
    %630 = vmatpush2.msra.mxu0 0.0
    %631 = vmatprep.subr.mxu0 0.0
    %632 = vmatpush2.msra.mxu0 0.0
    %633 = vmatprep.subr.mxu0 0.0
    %634 = vmatpush2.msra.mxu0 0.0
    %635 = vmatprep.subr.mxu0 0.0
    %636 = vmatpush2.msra.mxu0 0.0
    %637 = vmatprep.subr.mxu0 0.0
    %638 = vmatpush2.msra.mxu0 0.0
    %639 = vmatprep.subr.mxu0 0.0
    %640 = vmatpush2.msra.mxu0 0.0
    %641 = vmatprep.subr.mxu0 0.0
    %642 = vmatpush2.msra.mxu0 0.0
    %643 = vmatprep.subr.mxu0 0.0
    %644 = vmatpush2.msra.mxu0 0.0
    %645 = vmatprep.subr.mxu0 0.0
    %646 = vmatpush2.msra.mxu0 0.0
    %647 = vmatprep.subr.mxu0 0.0
    %648 = vmatpush2.msra.mxu0 0.0
    %649 = vmatprep.mubr.f32.mxu0 0.0
    %v650 = vand.u32 %v70, 4294901760
    %651 = vmatmul.mubr.f32.gmra.mxu0 %v650
    %v652 = vpop.f32.mrf.mxu0
    %v653 = vadd.f32 %v528, %v652
    %v654 = vpop.f32.mrf.mxu0
    %655 = vmatprep.mubr.f32.mxu0 0.0
    %v656 = vand.u32 %v73, 4294901760
    %657 = vmatmul.mubr.f32.gmra.mxu0 %v656
    %v658 = vpop.f32.mrf.mxu0
    %v659 = vadd.f32 %v536, %v658
    %v660 = vpop.f32.mrf.mxu0
    %661 = vmatprep.mubr.f32.mxu0 0.0
    %v662 = vand.u32 %v76, 4294901760
    %663 = vmatmul.mubr.f32.gmra.mxu0 %v662
    %v664 = vpop.f32.mrf.mxu0
    %v665 = vadd.f32 %v544, %v664
    %v666 = vpop.f32.mrf.mxu0
    %667 = vmatprep.mubr.f32.mxu0 0.0
    %v668 = vand.u32 %v79, 4294901760
    %669 = vmatmul.mubr.f32.gmra.mxu0 %v668
    %v670 = vpop.f32.mrf.mxu0
    %v671 = vadd.f32 %v552, %v670
    %v672 = vpop.f32.mrf.mxu0
    %673 = vdwg.mxu0
    %674 = vmatprep.subr.mxu0 0.0
    %675 = vmatpush1.msra.mxu0 0.0
    %676 = vmatprep.subr.mxu0 0.0
    %677 = vmatpush1.msra.mxu0 0.0
    %678 = vmatprep.subr.mxu0 0.0
    %679 = vmatpush1.msra.mxu0 0.0
    %680 = vmatprep.subr.mxu0 0.0
    %681 = vmatpush1.msra.mxu0 0.0
    %682 = vmatprep.subr.mxu0 0.0
    %683 = vmatpush1.msra.mxu0 0.0
    %684 = vmatprep.subr.mxu0 0.0
    %685 = vmatpush1.msra.mxu0 0.0
    %686 = vmatprep.subr.mxu0 0.0
    %v687 = vand.u32 %v67, 4294901760
    %688 = vmatpush1.msra.mxu0 %v687
    %689 = vmatprep.subr.mxu0 0.0
    %v690 = vand.u32 %v66, 4294901760
    %691 = vmatpush1.msra.mxu0 %v690
    %692 = vmatprep.subr.mxu0 0.0
    %v693 = vand.u32 %v65, 4294901760
    %694 = vmatpush1.msra.mxu0 %v693
    %695 = vmatprep.subr.mxu0 0.0
    %v696 = vand.u32 %v64, 4294901760
    %697 = vmatpush1.msra.mxu0 %v696
    %698 = vmatprep.subr.mxu0 0.0
    %v699 = vand.u32 %v63, 4294901760
    %700 = vmatpush1.msra.mxu0 %v699
    %701 = vmatprep.subr.mxu0 0.0
    %v702 = vand.u32 %v62, 4294901760
    %703 = vmatpush1.msra.mxu0 %v702
    %704 = vmatprep.subr.mxu0 0.0
    %v705 = vand.u32 %v61, 4294901760
    %706 = vmatpush1.msra.mxu0 %v705
    %707 = vmatprep.subr.mxu0 0.0
    %v708 = vand.u32 %v60, 4294901760
    %709 = vmatpush1.msra.mxu0 %v708
    %710 = vmatprep.subr.mxu0 0.0
    %v711 = vand.u32 %v59, 4294901760
    %712 = vmatpush1.msra.mxu0 %v711
    %713 = vmatprep.subr.mxu0 0.0
    %v714 = vand.u32 %v58, 4294901760
    %715 = vmatpush1.msra.mxu0 %v714
    %716 = vmatprep.subr.mxu0 0.0
    %717 = vmatpush2.msra.mxu0 0.0
    %718 = vmatprep.subr.mxu0 0.0
    %719 = vmatpush2.msra.mxu0 0.0
    %720 = vmatprep.subr.mxu0 0.0
    %721 = vmatpush2.msra.mxu0 0.0
    %722 = vmatprep.subr.mxu0 0.0
    %723 = vmatpush2.msra.mxu0 0.0
    %724 = vmatprep.subr.mxu0 0.0
    %725 = vmatpush2.msra.mxu0 0.0
    %726 = vmatprep.subr.mxu0 0.0
    %727 = vmatpush2.msra.mxu0 0.0
    %728 = vmatprep.subr.mxu0 0.0
    %729 = vmatpush2.msra.mxu0 0.0
    %730 = vmatprep.subr.mxu0 0.0
    %731 = vmatpush2.msra.mxu0 0.0
    %732 = vmatprep.subr.mxu0 0.0
    %733 = vmatpush2.msra.mxu0 0.0
    %734 = vmatprep.subr.mxu0 0.0
    %735 = vmatpush2.msra.mxu0 0.0
    %736 = vmatprep.subr.mxu0 0.0
    %737 = vmatpush2.msra.mxu0 0.0
    %738 = vmatprep.subr.mxu0 0.0
    %739 = vmatpush2.msra.mxu0 0.0
    %740 = vmatprep.subr.mxu0 0.0
    %741 = vmatpush2.msra.mxu0 0.0
    %742 = vmatprep.subr.mxu0 0.0
    %743 = vmatpush2.msra.mxu0 0.0
    %744 = vmatprep.subr.mxu0 0.0
    %745 = vmatpush2.msra.mxu0 0.0
    %746 = vmatprep.subr.mxu0 0.0
    %747 = vmatpush2.msra.mxu0 0.0
    %748 = vmatprep.mubr.f32.mxu0 0.0
    %v749 = vand.u32 %v70, 4294901760
    %750 = vmatmul.mubr.f32.gmra.mxu0 %v749
    %v751 = vpop.f32.mrf.mxu0
    %v752 = vadd.f32 %v653, %v751
    %v753 = vpop.f32.mrf.mxu0
    %754 = vmatprep.mubr.f32.mxu0 0.0
    %v755 = vand.u32 %v73, 4294901760
    %756 = vmatmul.mubr.f32.gmra.mxu0 %v755
    %v757 = vpop.f32.mrf.mxu0
    %v758 = vadd.f32 %v659, %v757
    %v759 = vpop.f32.mrf.mxu0
    %760 = vmatprep.mubr.f32.mxu0 0.0
    %v761 = vand.u32 %v76, 4294901760
    %762 = vmatmul.mubr.f32.gmra.mxu0 %v761
    %v763 = vpop.f32.mrf.mxu0
    %v764 = vadd.f32 %v665, %v763
    %v765 = vpop.f32.mrf.mxu0
    %766 = vmatprep.mubr.f32.mxu0 0.0
    %v767 = vand.u32 %v79, 4294901760
    %768 = vmatmul.mubr.f32.gmra.mxu0 %v767
    %v769 = vpop.f32.mrf.mxu0
    %v770 = vadd.f32 %v671, %v769
    %v771 = vpop.f32.mrf.mxu0
    %772 = vdwg.mxu0
    %v773 = vmax.f32 %v752, 0.0
    %v774 = vmax.f32 %v758, 0.0
    %v775 = vmax.f32 %v764, 0.0
    %v776 = vmax.f32 %v770, 0.0
    %v777 = vld [vmem:[#allocation5] sm:$0xff]
    %vm778 = vcmask 261120
    %v780 = vsel %vm778, %v777, 0
    %782 = vmatprep.subr.mxu0 0.0
    %783 = vmatpush1.msra.mxu0 0.0
    %784 = vmatprep.subr.mxu0 0.0
    %785 = vmatpush1.msra.mxu0 0.0
    %786 = vmatprep.subr.mxu0 0.0
    %787 = vmatpush1.msra.mxu0 0.0
    %788 = vmatprep.subr.mxu0 0.0
    %789 = vmatpush1.msra.mxu0 0.0
    %790 = vmatprep.subr.mxu0 0.0
    %791 = vmatpush1.msra.mxu0 0.0
    %792 = vmatprep.subr.mxu0 0.0
    %793 = vmatpush1.msra.mxu0 0.0
    %794 = vmatprep.subr.mxu0 0.0
    %795 = vmatpush1.msra.mxu0 0.0
    %796 = vmatprep.subr.mxu0 0.0
    %797 = vmatpush1.msra.mxu0 0.0
    %798 = vmatprep.subr.mxu0 0.0
    %799 = vmatpush1.msra.mxu0 0.0
    %800 = vmatprep.subr.mxu0 0.0
    %801 = vmatpush1.msra.mxu0 0.0
    %802 = vmatprep.subr.mxu0 0.0
    %803 = vmatpush1.msra.mxu0 0.0
    %804 = vmatprep.subr.mxu0 0.0
    %805 = vmatpush1.msra.mxu0 0.0
    %806 = vmatprep.subr.mxu0 0.0
    %v807 = vand.u32 %v776, 4294901760
    %808 = vmatpush1.msra.mxu0 %v807
    %809 = vmatprep.subr.mxu0 0.0
    %v810 = vand.u32 %v775, 4294901760
    %811 = vmatpush1.msra.mxu0 %v810
    %812 = vmatprep.subr.mxu0 0.0
    %v813 = vand.u32 %v774, 4294901760
    %814 = vmatpush1.msra.mxu0 %v813
    %815 = vmatprep.subr.mxu0 0.0
    %v816 = vand.u32 %v773, 4294901760
    %817 = vmatpush1.msra.mxu0 %v816
    %818 = vmatprep.subr.mxu0 0.0
    %819 = vmatpush2.msra.mxu0 0.0
    %820 = vmatprep.subr.mxu0 0.0
    %821 = vmatpush2.msra.mxu0 0.0
    %822 = vmatprep.subr.mxu0 0.0
    %823 = vmatpush2.msra.mxu0 0.0
    %824 = vmatprep.subr.mxu0 0.0
    %825 = vmatpush2.msra.mxu0 0.0
    %826 = vmatprep.subr.mxu0 0.0
    %827 = vmatpush2.msra.mxu0 0.0
    %828 = vmatprep.subr.mxu0 0.0
    %829 = vmatpush2.msra.mxu0 0.0
    %830 = vmatprep.subr.mxu0 0.0
    %831 = vmatpush2.msra.mxu0 0.0
    %832 = vmatprep.subr.mxu0 0.0
    %833 = vmatpush2.msra.mxu0 0.0
    %834 = vmatprep.subr.mxu0 0.0
    %835 = vmatpush2.msra.mxu0 0.0
    %836 = vmatprep.subr.mxu0 0.0
    %837 = vmatpush2.msra.mxu0 0.0
    %838 = vmatprep.subr.mxu0 0.0
    %839 = vmatpush2.msra.mxu0 0.0
    %840 = vmatprep.subr.mxu0 0.0
    %841 = vmatpush2.msra.mxu0 0.0
    %842 = vmatprep.subr.mxu0 0.0
    %843 = vmatpush2.msra.mxu0 0.0
    %844 = vmatprep.subr.mxu0 0.0
    %845 = vmatpush2.msra.mxu0 0.0
    %846 = vmatprep.subr.mxu0 0.0
    %847 = vmatpush2.msra.mxu0 0.0
    %848 = vmatprep.subr.mxu0 0.0
    %849 = vmatpush2.msra.mxu0 0.0
    %850 = vmatprep.mubr.f32.mxu0 0.0
    %v851 = vand.u32 %v780, 4294901760
    %v852 = vsub.f32 %v780, %v851
    %v853 = vand.u32 %v852, 4294901760
    %v854 = vsub.f32 %v852, %v853
    %v855 = vand.u32 %v854, 4294901760
    %856 = vmatmul.mubr.f32.gmra.mxu0 %v855
    %v857 = vpop.f32.mrf.mxu0
    %v858 = vadd.f32 0.0, %v857
    %v859 = vpop.f32.mrf.mxu0
    %860 = vdwg.mxu0
    %861 = vmatprep.subr.mxu0 0.0
    %862 = vmatpush1.msra.mxu0 0.0
    %863 = vmatprep.subr.mxu0 0.0
    %864 = vmatpush1.msra.mxu0 0.0
    %865 = vmatprep.subr.mxu0 0.0
    %866 = vmatpush1.msra.mxu0 0.0
    %867 = vmatprep.subr.mxu0 0.0
    %868 = vmatpush1.msra.mxu0 0.0
    %869 = vmatprep.subr.mxu0 0.0
    %870 = vmatpush1.msra.mxu0 0.0
    %871 = vmatprep.subr.mxu0 0.0
    %872 = vmatpush1.msra.mxu0 0.0
    %873 = vmatprep.subr.mxu0 0.0
    %874 = vmatpush1.msra.mxu0 0.0
    %875 = vmatprep.subr.mxu0 0.0
    %876 = vmatpush1.msra.mxu0 0.0
    %877 = vmatprep.subr.mxu0 0.0
    %878 = vmatpush1.msra.mxu0 0.0
    %879 = vmatprep.subr.mxu0 0.0
    %880 = vmatpush1.msra.mxu0 0.0
    %881 = vmatprep.subr.mxu0 0.0
    %882 = vmatpush1.msra.mxu0 0.0
    %883 = vmatprep.subr.mxu0 0.0
    %884 = vmatpush1.msra.mxu0 0.0
    %885 = vmatprep.subr.mxu0 0.0
    %v886 = vand.u32 %v776, 4294901760
    %v887 = vsub.f32 %v776, %v886
    %v888 = vand.u32 %v887, 4294901760
    %v889 = vsub.f32 %v887, %v888
    %v890 = vand.u32 %v889, 4294901760
    %891 = vmatpush1.msra.mxu0 %v890
    %892 = vmatprep.subr.mxu0 0.0
    %v893 = vand.u32 %v775, 4294901760
    %v894 = vsub.f32 %v775, %v893
    %v895 = vand.u32 %v894, 4294901760
    %v896 = vsub.f32 %v894, %v895
    %v897 = vand.u32 %v896, 4294901760
    %898 = vmatpush1.msra.mxu0 %v897
    %899 = vmatprep.subr.mxu0 0.0
    %v900 = vand.u32 %v774, 4294901760
    %v901 = vsub.f32 %v774, %v900
    %v902 = vand.u32 %v901, 4294901760
    %v903 = vsub.f32 %v901, %v902
    %v904 = vand.u32 %v903, 4294901760
    %905 = vmatpush1.msra.mxu0 %v904
    %906 = vmatprep.subr.mxu0 0.0
    %v907 = vand.u32 %v773, 4294901760
    %v908 = vsub.f32 %v773, %v907
    %v909 = vand.u32 %v908, 4294901760
    %v910 = vsub.f32 %v908, %v909
    %v911 = vand.u32 %v910, 4294901760
    %912 = vmatpush1.msra.mxu0 %v911
    %913 = vmatprep.subr.mxu0 0.0
    %914 = vmatpush2.msra.mxu0 0.0
    %915 = vmatprep.subr.mxu0 0.0
    %916 = vmatpush2.msra.mxu0 0.0
    %917 = vmatprep.subr.mxu0 0.0
    %918 = vmatpush2.msra.mxu0 0.0
    %919 = vmatprep.subr.mxu0 0.0
    %920 = vmatpush2.msra.mxu0 0.0
    %921 = vmatprep.subr.mxu0 0.0
    %922 = vmatpush2.msra.mxu0 0.0
    %923 = vmatprep.subr.mxu0 0.0
    %924 = vmatpush2.msra.mxu0 0.0
    %925 = vmatprep.subr.mxu0 0.0
    %926 = vmatpush2.msra.mxu0 0.0
    %927 = vmatprep.subr.mxu0 0.0
    %928 = vmatpush2.msra.mxu0 0.0
    %929 = vmatprep.subr.mxu0 0.0
    %930 = vmatpush2.msra.mxu0 0.0
    %931 = vmatprep.subr.mxu0 0.0
    %932 = vmatpush2.msra.mxu0 0.0
    %933 = vmatprep.subr.mxu0 0.0
    %934 = vmatpush2.msra.mxu0 0.0
    %935 = vmatprep.subr.mxu0 0.0
    %936 = vmatpush2.msra.mxu0 0.0
    %937 = vmatprep.subr.mxu0 0.0
    %938 = vmatpush2.msra.mxu0 0.0
    %939 = vmatprep.subr.mxu0 0.0
    %940 = vmatpush2.msra.mxu0 0.0
    %941 = vmatprep.subr.mxu0 0.0
    %942 = vmatpush2.msra.mxu0 0.0
    %943 = vmatprep.subr.mxu0 0.0
    %944 = vmatpush2.msra.mxu0 0.0
    %945 = vmatprep.mubr.f32.mxu0 0.0
    %v946 = vand.u32 %v780, 4294901760
    %947 = vmatmul.mubr.f32.gmra.mxu0 %v946
    %v948 = vpop.f32.mrf.mxu0
    %v949 = vadd.f32 %v858, %v948
    %v950 = vpop.f32.mrf.mxu0
    %951 = vdwg.mxu0
    %952 = vmatprep.subr.mxu0 0.0
    %953 = vmatpush1.msra.mxu0 0.0
    %954 = vmatprep.subr.mxu0 0.0
    %955 = vmatpush1.msra.mxu0 0.0
    %956 = vmatprep.subr.mxu0 0.0
    %957 = vmatpush1.msra.mxu0 0.0
    %958 = vmatprep.subr.mxu0 0.0
    %959 = vmatpush1.msra.mxu0 0.0
    %960 = vmatprep.subr.mxu0 0.0
    %961 = vmatpush1.msra.mxu0 0.0
    %962 = vmatprep.subr.mxu0 0.0
    %963 = vmatpush1.msra.mxu0 0.0
    %964 = vmatprep.subr.mxu0 0.0
    %965 = vmatpush1.msra.mxu0 0.0
    %966 = vmatprep.subr.mxu0 0.0
    %967 = vmatpush1.msra.mxu0 0.0
    %968 = vmatprep.subr.mxu0 0.0
    %969 = vmatpush1.msra.mxu0 0.0
    %970 = vmatprep.subr.mxu0 0.0
    %971 = vmatpush1.msra.mxu0 0.0
    %972 = vmatprep.subr.mxu0 0.0
    %973 = vmatpush1.msra.mxu0 0.0
    %974 = vmatprep.subr.mxu0 0.0
    %975 = vmatpush1.msra.mxu0 0.0
    %976 = vmatprep.subr.mxu0 0.0
    %v977 = vand.u32 %v776, 4294901760
    %v978 = vsub.f32 %v776, %v977
    %979 = vmatpush1.msra.mxu0 %v978
    %980 = vmatprep.subr.mxu0 0.0
    %v981 = vand.u32 %v775, 4294901760
    %v982 = vsub.f32 %v775, %v981
    %983 = vmatpush1.msra.mxu0 %v982
    %984 = vmatprep.subr.mxu0 0.0
    %v985 = vand.u32 %v774, 4294901760
    %v986 = vsub.f32 %v774, %v985
    %987 = vmatpush1.msra.mxu0 %v986
    %988 = vmatprep.subr.mxu0 0.0
    %v989 = vand.u32 %v773, 4294901760
    %v990 = vsub.f32 %v773, %v989
    %991 = vmatpush1.msra.mxu0 %v990
    %992 = vmatprep.subr.mxu0 0.0
    %993 = vmatpush2.msra.mxu0 0.0
    %994 = vmatprep.subr.mxu0 0.0
    %995 = vmatpush2.msra.mxu0 0.0
    %996 = vmatprep.subr.mxu0 0.0
    %997 = vmatpush2.msra.mxu0 0.0
    %998 = vmatprep.subr.mxu0 0.0
    %999 = vmatpush2.msra.mxu0 0.0
    %1000 = vmatprep.subr.mxu0 0.0
    %1001 = vmatpush2.msra.mxu0 0.0
    %1002 = vmatprep.subr.mxu0 0.0
    %1003 = vmatpush2.msra.mxu0 0.0
    %1004 = vmatprep.subr.mxu0 0.0
    %1005 = vmatpush2.msra.mxu0 0.0
    %1006 = vmatprep.subr.mxu0 0.0
    %1007 = vmatpush2.msra.mxu0 0.0
    %1008 = vmatprep.subr.mxu0 0.0
    %1009 = vmatpush2.msra.mxu0 0.0
    %1010 = vmatprep.subr.mxu0 0.0
    %1011 = vmatpush2.msra.mxu0 0.0
    %1012 = vmatprep.subr.mxu0 0.0
    %1013 = vmatpush2.msra.mxu0 0.0
    %1014 = vmatprep.subr.mxu0 0.0
    %1015 = vmatpush2.msra.mxu0 0.0
    %1016 = vmatprep.subr.mxu0 0.0
    %1017 = vmatpush2.msra.mxu0 0.0
    %1018 = vmatprep.subr.mxu0 0.0
    %1019 = vmatpush2.msra.mxu0 0.0
    %1020 = vmatprep.subr.mxu0 0.0
    %1021 = vmatpush2.msra.mxu0 0.0
    %1022 = vmatprep.subr.mxu0 0.0
    %1023 = vmatpush2.msra.mxu0 0.0
    %1024 = vmatprep.mubr.f32.mxu0 0.0
    %v1025 = vand.u32 %v780, 4294901760
    %v1026 = vsub.f32 %v780, %v1025
    %1027 = vmatmul.mubr.f32.gmra.mxu0 %v1026
    %v1028 = vpop.f32.mrf.mxu0
    %v1029 = vadd.f32 %v949, %v1028
    %v1030 = vpop.f32.mrf.mxu0
    %1031 = vdwg.mxu0
    %1032 = vmatprep.subr.mxu0 0.0
    %1033 = vmatpush1.msra.mxu0 0.0
    %1034 = vmatprep.subr.mxu0 0.0
    %1035 = vmatpush1.msra.mxu0 0.0
    %1036 = vmatprep.subr.mxu0 0.0
    %1037 = vmatpush1.msra.mxu0 0.0
    %1038 = vmatprep.subr.mxu0 0.0
    %1039 = vmatpush1.msra.mxu0 0.0
    %1040 = vmatprep.subr.mxu0 0.0
    %1041 = vmatpush1.msra.mxu0 0.0
    %1042 = vmatprep.subr.mxu0 0.0
    %1043 = vmatpush1.msra.mxu0 0.0
    %1044 = vmatprep.subr.mxu0 0.0
    %1045 = vmatpush1.msra.mxu0 0.0
    %1046 = vmatprep.subr.mxu0 0.0
    %1047 = vmatpush1.msra.mxu0 0.0
    %1048 = vmatprep.subr.mxu0 0.0
    %1049 = vmatpush1.msra.mxu0 0.0
    %1050 = vmatprep.subr.mxu0 0.0
    %1051 = vmatpush1.msra.mxu0 0.0
    %1052 = vmatprep.subr.mxu0 0.0
    %1053 = vmatpush1.msra.mxu0 0.0
    %1054 = vmatprep.subr.mxu0 0.0
    %1055 = vmatpush1.msra.mxu0 0.0
    %1056 = vmatprep.subr.mxu0 0.0
    %v1057 = vand.u32 %v776, 4294901760
    %1058 = vmatpush1.msra.mxu0 %v1057
    %1059 = vmatprep.subr.mxu0 0.0
    %v1060 = vand.u32 %v775, 4294901760
    %1061 = vmatpush1.msra.mxu0 %v1060
    %1062 = vmatprep.subr.mxu0 0.0
    %v1063 = vand.u32 %v774, 4294901760
    %1064 = vmatpush1.msra.mxu0 %v1063
    %1065 = vmatprep.subr.mxu0 0.0
    %v1066 = vand.u32 %v773, 4294901760
    %1067 = vmatpush1.msra.mxu0 %v1066
    %1068 = vmatprep.subr.mxu0 0.0
    %1069 = vmatpush2.msra.mxu0 0.0
    %1070 = vmatprep.subr.mxu0 0.0
    %1071 = vmatpush2.msra.mxu0 0.0
    %1072 = vmatprep.subr.mxu0 0.0
    %1073 = vmatpush2.msra.mxu0 0.0
    %1074 = vmatprep.subr.mxu0 0.0
    %1075 = vmatpush2.msra.mxu0 0.0
    %1076 = vmatprep.subr.mxu0 0.0
    %1077 = vmatpush2.msra.mxu0 0.0
    %1078 = vmatprep.subr.mxu0 0.0
    %1079 = vmatpush2.msra.mxu0 0.0
    %1080 = vmatprep.subr.mxu0 0.0
    %1081 = vmatpush2.msra.mxu0 0.0
    %1082 = vmatprep.subr.mxu0 0.0
    %1083 = vmatpush2.msra.mxu0 0.0
    %1084 = vmatprep.subr.mxu0 0.0
    %1085 = vmatpush2.msra.mxu0 0.0
    %1086 = vmatprep.subr.mxu0 0.0
    %1087 = vmatpush2.msra.mxu0 0.0
    %1088 = vmatprep.subr.mxu0 0.0
    %1089 = vmatpush2.msra.mxu0 0.0
    %1090 = vmatprep.subr.mxu0 0.0
    %1091 = vmatpush2.msra.mxu0 0.0
    %1092 = vmatprep.subr.mxu0 0.0
    %1093 = vmatpush2.msra.mxu0 0.0
    %1094 = vmatprep.subr.mxu0 0.0
    %1095 = vmatpush2.msra.mxu0 0.0
    %1096 = vmatprep.subr.mxu0 0.0
    %1097 = vmatpush2.msra.mxu0 0.0
    %1098 = vmatprep.subr.mxu0 0.0
    %1099 = vmatpush2.msra.mxu0 0.0
    %1100 = vmatprep.mubr.f32.mxu0 0.0
    %v1101 = vand.u32 %v780, 4294901760
    %v1102 = vsub.f32 %v780, %v1101
    %v1103 = vand.u32 %v1102, 4294901760
    %1104 = vmatmul.mubr.f32.gmra.mxu0 %v1103
    %v1105 = vpop.f32.mrf.mxu0
    %v1106 = vadd.f32 %v1029, %v1105
    %v1107 = vpop.f32.mrf.mxu0
    %1108 = vdwg.mxu0
    %1109 = vmatprep.subr.mxu0 0.0
    %1110 = vmatpush1.msra.mxu0 0.0
    %1111 = vmatprep.subr.mxu0 0.0
    %1112 = vmatpush1.msra.mxu0 0.0
    %1113 = vmatprep.subr.mxu0 0.0
    %1114 = vmatpush1.msra.mxu0 0.0
    %1115 = vmatprep.subr.mxu0 0.0
    %1116 = vmatpush1.msra.mxu0 0.0
    %1117 = vmatprep.subr.mxu0 0.0
    %1118 = vmatpush1.msra.mxu0 0.0
    %1119 = vmatprep.subr.mxu0 0.0
    %1120 = vmatpush1.msra.mxu0 0.0
    %1121 = vmatprep.subr.mxu0 0.0
    %1122 = vmatpush1.msra.mxu0 0.0
    %1123 = vmatprep.subr.mxu0 0.0
    %1124 = vmatpush1.msra.mxu0 0.0
    %1125 = vmatprep.subr.mxu0 0.0
    %1126 = vmatpush1.msra.mxu0 0.0
    %1127 = vmatprep.subr.mxu0 0.0
    %1128 = vmatpush1.msra.mxu0 0.0
    %1129 = vmatprep.subr.mxu0 0.0
    %1130 = vmatpush1.msra.mxu0 0.0
    %1131 = vmatprep.subr.mxu0 0.0
    %1132 = vmatpush1.msra.mxu0 0.0
    %1133 = vmatprep.subr.mxu0 0.0
    %v1134 = vand.u32 %v776, 4294901760
    %v1135 = vsub.f32 %v776, %v1134
    %v1136 = vand.u32 %v1135, 4294901760
    %1137 = vmatpush1.msra.mxu0 %v1136
    %1138 = vmatprep.subr.mxu0 0.0
    %v1139 = vand.u32 %v775, 4294901760
    %v1140 = vsub.f32 %v775, %v1139
    %v1141 = vand.u32 %v1140, 4294901760
    %1142 = vmatpush1.msra.mxu0 %v1141
    %1143 = vmatprep.subr.mxu0 0.0
    %v1144 = vand.u32 %v774, 4294901760
    %v1145 = vsub.f32 %v774, %v1144
    %v1146 = vand.u32 %v1145, 4294901760
    %1147 = vmatpush1.msra.mxu0 %v1146
    %1148 = vmatprep.subr.mxu0 0.0
    %v1149 = vand.u32 %v773, 4294901760
    %v1150 = vsub.f32 %v773, %v1149
    %v1151 = vand.u32 %v1150, 4294901760
    %1152 = vmatpush1.msra.mxu0 %v1151
    %1153 = vmatprep.subr.mxu0 0.0
    %1154 = vmatpush2.msra.mxu0 0.0
    %1155 = vmatprep.subr.mxu0 0.0
    %1156 = vmatpush2.msra.mxu0 0.0
    %1157 = vmatprep.subr.mxu0 0.0
    %1158 = vmatpush2.msra.mxu0 0.0
    %1159 = vmatprep.subr.mxu0 0.0
    %1160 = vmatpush2.msra.mxu0 0.0
    %1161 = vmatprep.subr.mxu0 0.0
    %1162 = vmatpush2.msra.mxu0 0.0
    %1163 = vmatprep.subr.mxu0 0.0
    %1164 = vmatpush2.msra.mxu0 0.0
    %1165 = vmatprep.subr.mxu0 0.0
    %1166 = vmatpush2.msra.mxu0 0.0
    %1167 = vmatprep.subr.mxu0 0.0
    %1168 = vmatpush2.msra.mxu0 0.0
    %1169 = vmatprep.subr.mxu0 0.0
    %1170 = vmatpush2.msra.mxu0 0.0
    %1171 = vmatprep.subr.mxu0 0.0
    %1172 = vmatpush2.msra.mxu0 0.0
    %1173 = vmatprep.subr.mxu0 0.0
    %1174 = vmatpush2.msra.mxu0 0.0
    %1175 = vmatprep.subr.mxu0 0.0
    %1176 = vmatpush2.msra.mxu0 0.0
    %1177 = vmatprep.subr.mxu0 0.0
    %1178 = vmatpush2.msra.mxu0 0.0
    %1179 = vmatprep.subr.mxu0 0.0
    %1180 = vmatpush2.msra.mxu0 0.0
    %1181 = vmatprep.subr.mxu0 0.0
    %1182 = vmatpush2.msra.mxu0 0.0
    %1183 = vmatprep.subr.mxu0 0.0
    %1184 = vmatpush2.msra.mxu0 0.0
    %1185 = vmatprep.mubr.f32.mxu0 0.0
    %v1186 = vand.u32 %v780, 4294901760
    %1187 = vmatmul.mubr.f32.gmra.mxu0 %v1186
    %v1188 = vpop.f32.mrf.mxu0
    %v1189 = vadd.f32 %v1106, %v1188
    %v1190 = vpop.f32.mrf.mxu0
    %1191 = vdwg.mxu0
    %1192 = vmatprep.subr.mxu0 0.0
    %1193 = vmatpush1.msra.mxu0 0.0
    %1194 = vmatprep.subr.mxu0 0.0
    %1195 = vmatpush1.msra.mxu0 0.0
    %1196 = vmatprep.subr.mxu0 0.0
    %1197 = vmatpush1.msra.mxu0 0.0
    %1198 = vmatprep.subr.mxu0 0.0
    %1199 = vmatpush1.msra.mxu0 0.0
    %1200 = vmatprep.subr.mxu0 0.0
    %1201 = vmatpush1.msra.mxu0 0.0
    %1202 = vmatprep.subr.mxu0 0.0
    %1203 = vmatpush1.msra.mxu0 0.0
    %1204 = vmatprep.subr.mxu0 0.0
    %1205 = vmatpush1.msra.mxu0 0.0
    %1206 = vmatprep.subr.mxu0 0.0
    %1207 = vmatpush1.msra.mxu0 0.0
    %1208 = vmatprep.subr.mxu0 0.0
    %1209 = vmatpush1.msra.mxu0 0.0
    %1210 = vmatprep.subr.mxu0 0.0
    %1211 = vmatpush1.msra.mxu0 0.0
    %1212 = vmatprep.subr.mxu0 0.0
    %1213 = vmatpush1.msra.mxu0 0.0
    %1214 = vmatprep.subr.mxu0 0.0
    %1215 = vmatpush1.msra.mxu0 0.0
    %1216 = vmatprep.subr.mxu0 0.0
    %v1217 = vand.u32 %v776, 4294901760
    %1218 = vmatpush1.msra.mxu0 %v1217
    %1219 = vmatprep.subr.mxu0 0.0
    %v1220 = vand.u32 %v775, 4294901760
    %1221 = vmatpush1.msra.mxu0 %v1220
    %1222 = vmatprep.subr.mxu0 0.0
    %v1223 = vand.u32 %v774, 4294901760
    %1224 = vmatpush1.msra.mxu0 %v1223
    %1225 = vmatprep.subr.mxu0 0.0
    %v1226 = vand.u32 %v773, 4294901760
    %1227 = vmatpush1.msra.mxu0 %v1226
    %1228 = vmatprep.subr.mxu0 0.0
    %1229 = vmatpush2.msra.mxu0 0.0
    %1230 = vmatprep.subr.mxu0 0.0
    %1231 = vmatpush2.msra.mxu0 0.0
    %1232 = vmatprep.subr.mxu0 0.0
    %1233 = vmatpush2.msra.mxu0 0.0
    %1234 = vmatprep.subr.mxu0 0.0
    %1235 = vmatpush2.msra.mxu0 0.0
    %1236 = vmatprep.subr.mxu0 0.0
    %1237 = vmatpush2.msra.mxu0 0.0
    %1238 = vmatprep.subr.mxu0 0.0
    %1239 = vmatpush2.msra.mxu0 0.0
    %1240 = vmatprep.subr.mxu0 0.0
    %1241 = vmatpush2.msra.mxu0 0.0
    %1242 = vmatprep.subr.mxu0 0.0
    %1243 = vmatpush2.msra.mxu0 0.0
    %1244 = vmatprep.subr.mxu0 0.0
    %1245 = vmatpush2.msra.mxu0 0.0
    %1246 = vmatprep.subr.mxu0 0.0
    %1247 = vmatpush2.msra.mxu0 0.0
    %1248 = vmatprep.subr.mxu0 0.0
    %1249 = vmatpush2.msra.mxu0 0.0
    %1250 = vmatprep.subr.mxu0 0.0
    %1251 = vmatpush2.msra.mxu0 0.0
    %1252 = vmatprep.subr.mxu0 0.0
    %1253 = vmatpush2.msra.mxu0 0.0
    %1254 = vmatprep.subr.mxu0 0.0
    %1255 = vmatpush2.msra.mxu0 0.0
    %1256 = vmatprep.subr.mxu0 0.0
    %1257 = vmatpush2.msra.mxu0 0.0
    %1258 = vmatprep.subr.mxu0 0.0
    %1259 = vmatpush2.msra.mxu0 0.0
    %1260 = vmatprep.mubr.f32.mxu0 0.0
    %v1261 = vand.u32 %v780, 4294901760
    %1262 = vmatmul.mubr.f32.gmra.mxu0 %v1261
    %v1263 = vpop.f32.mrf.mxu0
    %v1264 = vadd.f32 %v1189, %v1263
    %v1265 = vpop.f32.mrf.mxu0
    %1266 = vdwg.mxu0
    %v1267 = vmax.f32 %v1264, 0.0
    %1268 = vst [vmem:[#allocation8] sm:$0xff] %v1267
    // Predicated region
    $region26: #{tpu_custom_call.1} parent=1 // pred_check
      _
    $region27: #{tpu_custom_call.1} parent=1 // pred_check_branch
      %1270 = sbr.rel (0) target = $region29
    $region28: #{tpu_custom_call.1} parent=1 // pred_region
      %s1272 = ssub.s32 128, 128
      %1273 = vsyncadd [#allocation4], %s1272
      %s1275 = sshll.u32 [#allocation8], 4
      %s1276 = int_to_ptr.vmem [resolvable:$true] %s1275
      %1278 = dma.vmem_to_hbm [thread:$0]  %s1276, 128, %s3, [#allocation4]
    $region29: #{tpu_custom_call.1} parent=1 // pred_fallthru
      _
    // Predicated region
    $region30: #{tpu_custom_call.1} parent=1 // pred_check
      _
    $region31: #{tpu_custom_call.1} parent=1 // pred_check_branch
      %1280 = sbr.rel (0) target = $region33
    $region32: #{tpu_custom_call.1} parent=1 // pred_region
      %1281 = dma.done [#allocation4], 128
    $region33: #{tpu_custom_call.1} parent=1 // pred_fallthru
      _
    %1282 = vsyncpa [#allocation3], 1
    %1283 = vsyncpa [#allocation6], 1
    %1284 = vsyncpa [#allocation4], 1

</llo_original>
